<compile_context>
chip_gen: v5e
topology: v5e:2x2
jax: 0.10.0
libtpu: 0.0.40
codegen_flags: <defaults>
</compile_context>

<pallas_src>
import jax
import jax.numpy as jnp
from jax.experimental import pallas as pl
from jax.experimental.pallas import tpu as pltpu

WEIGHT_BITS = 4
ACT_MAX = 6.0
ACT_SCALE = ACT_MAX / (2 ** WEIGHT_BITS - 1)   # 0.4
INV_ACT_SCALE = 1.0 / ACT_SCALE                # 2.5

PAD = 128                                      # lane-dense padded width
BG = 16                                        # batch rows per grid step (bf16 sublane pack = 16)
NEG_BIG = -1e30                                # safe "-inf" for the running max init
LAYER_DIMS = [(16, 64), (64, 32), (32, 32), (32, 5)]
NUM_LAYERS = len(LAYER_DIMS)
OUT_FEATURES = LAYER_DIMS[-1][1]


def _quant_relu(z):
    """QuantReLU(bit_width=4, max_val=6): clamp to [0, 6], snap to the 0.4 grid."""
    y = jnp.clip(z, 0.0, ACT_MAX)
    return jnp.round(y * INV_ACT_SCALE) * ACT_SCALE


def mlp_softmax_kernel(x_ref, w_ref, b_ref, out_ref, z_ref, m_ref, l_ref):
    # x_ref:   (BG, 128)      bf16  one batch group (features zero-padded), streamed
    # w_ref:   (4, 128, 128)  bf16  VMEM-resident (constant index_map)
    # b_ref:   (4, 1, 128)    f32   VMEM-resident (constant index_map)
    # out_ref: (BG, 128)      f32   softmax over the WHOLE batch; valid cols 0..4
    # z_ref:   (B, 128)       f32   scratch: logits for the whole batch
    # m_ref:   (1, 128)       f32   scratch: running per-column max
    # l_ref:   (1, 128)       f32   scratch: running per-column sum of exp(z - m)
    p = pl.program_id(0)
    g = pl.program_id(1)
    row0 = pl.multiple_of(g * BG, BG)

    @pl.when(p == 0)
    def _pass0():
        @pl.when(g == 0)
        def _init():
            m_ref[...] = jnp.full(m_ref.shape, NEG_BIG, m_ref.dtype)
            l_ref[...] = jnp.zeros(l_ref.shape, l_ref.dtype)

        h = x_ref[...]                                        # bf16, no cast needed
        for i in range(NUM_LAYERS - 1):
            z = jnp.dot(h, w_ref[i], preferred_element_type=jnp.float32) + b_ref[i]
            h = _quant_relu(z).astype(jnp.bfloat16)
        z = jnp.dot(h, w_ref[NUM_LAYERS - 1],
                    preferred_element_type=jnp.float32) + b_ref[NUM_LAYERS - 1]

        z_ref[pl.ds(row0, BG), :] = z

        # Online softmax stats over the batch (sublane) axis — XLU reductions, cheap.
        m_new = jnp.maximum(m_ref[...], jnp.max(z, axis=0, keepdims=True))
        l_ref[...] = (l_ref[...] * jnp.exp(m_ref[...] - m_new)
                      + jnp.sum(jnp.exp(z - m_new), axis=0, keepdims=True))
        m_ref[...] = m_new

    @pl.when(p == 1)
    def _pass1():
        z = z_ref[pl.ds(row0, BG), :]
        e = jnp.exp(z - m_ref[...])
        inv_l = 1.0 / l_ref[...]          # exact normalization: one (1,128) divide
        out_ref[...] = e * inv_l


def fake_quant_weight(w, bits=WEIGHT_BITS):
    """Per-tensor symmetric int-N fake quantization (brevitas-style INT weights)."""
    qmax = 2 ** (bits - 1) - 1
    scale = jnp.maximum(jnp.max(jnp.abs(w)), 1e-8) / qmax
    return jnp.clip(jnp.round(w / scale), -qmax, qmax) * scale


def init_params(key):
    params = []
    for i, (fan_in, fan_out) in enumerate(LAYER_DIMS):
        kw, kb = jax.random.split(jax.random.fold_in(key, i))
        bound = 1.0 / jnp.sqrt(jnp.float32(fan_in))
        w = jax.random.uniform(kw, (fan_in, fan_out), jnp.float32, -bound, bound)
        b = jax.random.uniform(kb, (fan_out,), jnp.float32, -bound, bound)
        params.append((fake_quant_weight(w), b))
    return params


def pack_params(params):
    """Consolidate per-layer weights/biases into two padded slabs (2 DMAs total)."""
    w_slab = jnp.zeros((NUM_LAYERS, PAD, PAD), jnp.bfloat16)
    b_slab = jnp.zeros((NUM_LAYERS, 1, PAD), jnp.float32)
    for i, (w, b) in enumerate(params):
        fin, fout = w.shape
        w_slab = w_slab.at[i, :fin, :fout].set(w.astype(jnp.bfloat16))
        b_slab = b_slab.at[i, 0, :fout].set(b)
    return w_slab, b_slab


@jax.jit
def forward(x, w_slab, b_slab):
    B, F = x.shape
    assert B % BG == 0, f"batch size must be a multiple of {BG}"
    G = B // BG

    # Pad and cast the input to bf16 in the wrapper (pad already materializes a copy).
    x_pad = jnp.zeros((B, PAD), jnp.bfloat16).at[:, :F].set(x.astype(jnp.bfloat16))

    cost = pl.CostEstimate(
        flops=2 * NUM_LAYERS * B * PAD * PAD,
        transcendentals=2 * B * PAD,
        bytes_accessed=(B * PAD * 2                    # x (bf16)
                        + NUM_LAYERS * PAD * PAD * 2   # weights (bf16)
                        + NUM_LAYERS * PAD * 4         # biases (f32)
                        + B * PAD * 4),                # output (f32)
    )

    out_pad = pl.pallas_call(
        mlp_softmax_kernel,
        out_shape=jax.ShapeDtypeStruct((B, PAD), jnp.float32),
        grid_spec=pltpu.PrefetchScalarGridSpec(
            num_scalar_prefetch=0,
            grid=(2, G),                                  # (softmax pass, batch group)
            in_specs=[
                # x: streamed per group in pass 0; pinned to block 0 in pass 1 (unused).
                pl.BlockSpec((BG, PAD), lambda p, g: ((1 - p) * g, 0)),
                # Weights/biases: constant index_map -> DMA'd once, resident all grid steps.
                pl.BlockSpec((NUM_LAYERS, PAD, PAD), lambda p, g: (0, 0, 0)),
                pl.BlockSpec((NUM_LAYERS, 1, PAD), lambda p, g: (0, 0, 0)),
            ],
            # Pass 0 maps every step to block 0 (never written -> never flushed);
            # pass 1 writes one lane-dense (BG,128) block per group.
            out_specs=pl.BlockSpec((BG, PAD), lambda p, g: (p * g, 0)),
            scratch_shapes=[
                pltpu.VMEM((B, PAD), jnp.float32),   # whole-batch logits
                pltpu.VMEM((1, PAD), jnp.float32),   # running column max
                pltpu.VMEM((1, PAD), jnp.float32),   # running column sum-of-exp
            ],
        ),
        compiler_params=pltpu.CompilerParams(
            # Softmax(0) couples all batch groups -> both grid axes are sequential.
            # (Per-group softmax would allow ("arbitrary", "parallel") for 2-TC v7x.)
            dimension_semantics=("arbitrary", "arbitrary"),
        ),
        cost_estimate=cost,
    )(x_pad, w_slab, b_slab)
    return out_pad[:, :OUT_FEATURES]


def reference(x, w_slab, b_slab):
    """Pure-JAX reference mirroring the kernel's bf16 cast pattern (exact softmax)."""
    B, F = x.shape
    h = jnp.zeros((B, PAD), jnp.bfloat16).at[:, :F].set(x.astype(jnp.bfloat16))
    for i in range(NUM_LAYERS - 1):
        z = jnp.dot(h, w_slab[i], preferred_element_type=jnp.float32) + b_slab[i]
        h = _quant_relu(z).astype(jnp.bfloat16)
    z = jnp.dot(h, w_slab[NUM_LAYERS - 1],
                preferred_element_type=jnp.float32) + b_slab[NUM_LAYERS - 1]
    z = z - jnp.max(z, axis=0, keepdims=True)
    e = jnp.exp(z)
    return (e / jnp.sum(e, axis=0, keepdims=True))[:, :OUT_FEATURES]


if __name__ == "__main__":
    key = jax.random.PRNGKey(0)
    k_params, k_x = jax.random.split(key)

    params = init_params(k_params)
    w_slab, b_slab = pack_params(params)

    B, F = 64, LAYER_DIMS[0][0]                    # batch=64 (4 groups of 16), in_features=16
    x = jax.random.normal(k_x, (B, F), dtype=jnp.float32)

    out = jax.block_until_ready(forward(x, w_slab, b_slab))

    assert out.shape == (B, OUT_FEATURES)
    assert bool(jnp.all(jnp.isfinite(out)))
    # nn.Softmax(0): each of the 5 valid columns sums to ~1 over the WHOLE batch.
    assert jnp.allclose(jnp.sum(out, axis=0), 1.0, atol=1e-3)
    ref = reference(x, w_slab, b_slab)
    assert jnp.allclose(out, ref, atol=5e-2), float(jnp.max(jnp.abs(out - ref)))

    print("KERNEL_OK")
</pallas_src>

<mosaic_0001>
module attributes {stable_mosaic.version = 11 : i64} {
  func.func @mlp_softmax_kernel(%arg0: i32, %arg1: i32, %arg2: memref<16x128xbf16, #tpu.memory_space<vmem>>, %arg3: memref<4x128x128xbf16, #tpu.memory_space<vmem>>, %arg4: memref<4x1x128xf32, #tpu.memory_space<vmem>>, %arg5: memref<16x128xf32, #tpu.memory_space<vmem>>, %arg6: memref<64x128xf32, #tpu.memory_space<vmem>>, %arg7: memref<1x128xf32, #tpu.memory_space<vmem>>, %arg8: memref<1x128xf32, #tpu.memory_space<vmem>>) attributes {dimension_semantics = [#tpu.dimension_semantics<arbitrary>, #tpu.dimension_semantics<arbitrary>], iteration_bounds = array<i64: 2, 4>, scalar_prefetch = 0 : i64, scratch_operands = 3 : i64, tpu.core_type = #tpu.core_type<tc>, window_params = [{transform_indices = @transform_0, window_bounds = array<i64: 16, 128>}, {pipeline_mode = #tpu.pipeline_mode<synchronous>, transform_indices = @transform_1, window_bounds = array<i64: 4, 128, 128>}, {pipeline_mode = #tpu.pipeline_mode<synchronous>, transform_indices = @transform_2, window_bounds = array<i64: 4, 1, 128>}, {transform_indices = @transform_3, window_bounds = array<i64: 16, 128>}]} {
    %c16_i32 = arith.constant 16 : i32
    %0 = arith.muli %arg1, %c16_i32 : i32
    %1 = tpu.assume_multiple %0, 16 : i32
    %c0_i32 = arith.constant 0 : i32
    %2 = arith.cmpi eq, %arg0, %c0_i32 : i32
    %3 = arith.extui %2 : i1 to i32
    %c0_i32_0 = arith.constant 0 : i32
    %4 = arith.cmpi ne, %3, %c0_i32_0 : i32
    scf.if %4 {
      %c0_i32_2 = arith.constant 0 : i32
      %8 = arith.cmpi eq, %arg1, %c0_i32_2 : i32
      %9 = arith.extui %8 : i1 to i32
      %c0_i32_3 = arith.constant 0 : i32
      %10 = arith.cmpi ne, %9, %c0_i32_3 : i32
      scf.if %10 {
        %cst_54 = arith.constant -1.000000e+30 : f32
        %89 = vector.broadcast %cst_54 : f32 to vector<1x128xf32>
        %c0_55 = arith.constant 0 : index
        %c0_56 = arith.constant 0 : index
        %90 = vector.load %arg7[%c0_55, %c0_56] : memref<1x128xf32, #tpu.memory_space<vmem>>, vector<1x128xf32>
        tpu.vector_store %arg7[%c0_55, %c0_56], %89 {strides = array<i32>} : memref<1x128xf32, #tpu.memory_space<vmem>>, vector<1x128xf32>,
        %cst_57 = arith.constant 0.000000e+00 : f32
        %91 = vector.broadcast %cst_57 : f32 to vector<1x128xf32>
        %c0_58 = arith.constant 0 : index
        %c0_59 = arith.constant 0 : index
        %92 = vector.load %arg8[%c0_58, %c0_59] : memref<1x128xf32, #tpu.memory_space<vmem>>, vector<1x128xf32>
        tpu.vector_store %arg8[%c0_58, %c0_59], %91 {strides = array<i32>} : memref<1x128xf32, #tpu.memory_space<vmem>>, vector<1x128xf32>,
      } else {
      }
      %c0 = arith.constant 0 : index
      %c0_4 = arith.constant 0 : index
      %11 = vector.load %arg2[%c0, %c0_4] : memref<16x128xbf16, #tpu.memory_space<vmem>>, vector<16x128xbf16>
      %c0_5 = arith.constant 0 : index
      %c0_6 = arith.constant 0 : index
      %c0_7 = arith.constant 0 : index
      %12 = vector.load %arg3[%c0_5, %c0_6, %c0_7] : memref<4x128x128xbf16, #tpu.memory_space<vmem>>, vector<1x128x128xbf16>
      %13 = vector.shape_cast %12 : vector<1x128x128xbf16> to vector<128x128xbf16>
      %cst = arith.constant dense<0.000000e+00> : vector<16x128xf32>
      %14 = tpu.matmul %11, %13, %cst {dimension_numbers = #tpu.dot_dimension_numbers<[1], [0], [0], [1], [0, 0, 1, 1], [], []>} : vector<16x128xbf16>, vector<128x128xbf16>, vector<16x128xf32> -> vector<16x128xf32>
      %c0_8 = arith.constant 0 : index
      %c0_9 = arith.constant 0 : index
      %c0_10 = arith.constant 0 : index
      %15 = vector.load %arg4[%c0_8, %c0_9, %c0_10] : memref<4x1x128xf32, #tpu.memory_space<vmem>>, vector<1x1x128xf32>
      %16 = vector.shape_cast %15 : vector<1x1x128xf32> to vector<1x128xf32>
      %17 = vector.broadcast %16 : vector<1x128xf32> to vector<16x128xf32>
      %18 = arith.addf %14, %17 : vector<16x128xf32>
      %cst_11 = arith.constant 0.000000e+00 : f32
      %cst_12 = arith.constant 6.000000e+00 : f32
      %19 = vector.broadcast %cst_11 : f32 to vector<16x128xf32>
      %20 = arith.maximumf %19, %18 : vector<16x128xf32>
      %21 = vector.broadcast %cst_12 : f32 to vector<16x128xf32>
      %22 = arith.minimumf %21, %20 : vector<16x128xf32>
      %cst_13 = arith.constant 2.500000e+00 : f32
      %23 = vector.broadcast %cst_13 : f32 to vector<16x128xf32>
      %24 = arith.mulf %22, %23 : vector<16x128xf32>
      %25 = math.roundeven %24 : vector<16x128xf32>
      %cst_14 = arith.constant 4.000000e-01 : f32
      %26 = vector.broadcast %cst_14 : f32 to vector<16x128xf32>
      %27 = arith.mulf %25, %26 : vector<16x128xf32>
      %28 = arith.truncf %27 : vector<16x128xf32> to vector<16x128xbf16>
      %c1 = arith.constant 1 : index
      %c0_15 = arith.constant 0 : index
      %c0_16 = arith.constant 0 : index
      %29 = vector.load %arg3[%c1, %c0_15, %c0_16] : memref<4x128x128xbf16, #tpu.memory_space<vmem>>, vector<1x128x128xbf16>
      %30 = vector.shape_cast %29 : vector<1x128x128xbf16> to vector<128x128xbf16>
      %cst_17 = arith.constant dense<0.000000e+00> : vector<16x128xf32>
      %31 = tpu.matmul %28, %30, %cst_17 {dimension_numbers = #tpu.dot_dimension_numbers<[1], [0], [0], [1], [0, 0, 1, 1], [], []>} : vector<16x128xbf16>, vector<128x128xbf16>, vector<16x128xf32> -> vector<16x128xf32>
      %c1_18 = arith.constant 1 : index
      %c0_19 = arith.constant 0 : index
      %c0_20 = arith.constant 0 : index
      %32 = vector.load %arg4[%c1_18, %c0_19, %c0_20] : memref<4x1x128xf32, #tpu.memory_space<vmem>>, vector<1x1x128xf32>
      %33 = vector.shape_cast %32 : vector<1x1x128xf32> to vector<1x128xf32>
      %34 = vector.broadcast %33 : vector<1x128xf32> to vector<16x128xf32>
      %35 = arith.addf %31, %34 : vector<16x128xf32>
      %cst_21 = arith.constant 0.000000e+00 : f32
      %cst_22 = arith.constant 6.000000e+00 : f32
      %36 = vector.broadcast %cst_21 : f32 to vector<16x128xf32>
      %37 = arith.maximumf %36, %35 : vector<16x128xf32>
      %38 = vector.broadcast %cst_22 : f32 to vector<16x128xf32>
      %39 = arith.minimumf %38, %37 : vector<16x128xf32>
      %cst_23 = arith.constant 2.500000e+00 : f32
      %40 = vector.broadcast %cst_23 : f32 to vector<16x128xf32>
      %41 = arith.mulf %39, %40 : vector<16x128xf32>
      %42 = math.roundeven %41 : vector<16x128xf32>
      %cst_24 = arith.constant 4.000000e-01 : f32
      %43 = vector.broadcast %cst_24 : f32 to vector<16x128xf32>
      %44 = arith.mulf %42, %43 : vector<16x128xf32>
      %45 = arith.truncf %44 : vector<16x128xf32> to vector<16x128xbf16>
      %c2 = arith.constant 2 : index
      %c0_25 = arith.constant 0 : index
      %c0_26 = arith.constant 0 : index
      %46 = vector.load %arg3[%c2, %c0_25, %c0_26] : memref<4x128x128xbf16, #tpu.memory_space<vmem>>, vector<1x128x128xbf16>
      %47 = vector.shape_cast %46 : vector<1x128x128xbf16> to vector<128x128xbf16>
      %cst_27 = arith.constant dense<0.000000e+00> : vector<16x128xf32>
      %48 = tpu.matmul %45, %47, %cst_27 {dimension_numbers = #tpu.dot_dimension_numbers<[1], [0], [0], [1], [0, 0, 1, 1], [], []>} : vector<16x128xbf16>, vector<128x128xbf16>, vector<16x128xf32> -> vector<16x128xf32>
      %c2_28 = arith.constant 2 : index
      %c0_29 = arith.constant 0 : index
      %c0_30 = arith.constant 0 : index
      %49 = vector.load %arg4[%c2_28, %c0_29, %c0_30] : memref<4x1x128xf32, #tpu.memory_space<vmem>>, vector<1x1x128xf32>
      %50 = vector.shape_cast %49 : vector<1x1x128xf32> to vector<1x128xf32>
      %51 = vector.broadcast %50 : vector<1x128xf32> to vector<16x128xf32>
      %52 = arith.addf %48, %51 : vector<16x128xf32>
      %cst_31 = arith.constant 0.000000e+00 : f32
      %cst_32 = arith.constant 6.000000e+00 : f32
      %53 = vector.broadcast %cst_31 : f32 to vector<16x128xf32>
      %54 = arith.maximumf %53, %52 : vector<16x128xf32>
      %55 = vector.broadcast %cst_32 : f32 to vector<16x128xf32>
      %56 = arith.minimumf %55, %54 : vector<16x128xf32>
      %cst_33 = arith.constant 2.500000e+00 : f32
      %57 = vector.broadcast %cst_33 : f32 to vector<16x128xf32>
      %58 = arith.mulf %56, %57 : vector<16x128xf32>
      %59 = math.roundeven %58 : vector<16x128xf32>
      %cst_34 = arith.constant 4.000000e-01 : f32
      %60 = vector.broadcast %cst_34 : f32 to vector<16x128xf32>
      %61 = arith.mulf %59, %60 : vector<16x128xf32>
      %62 = arith.truncf %61 : vector<16x128xf32> to vector<16x128xbf16>
      %c3 = arith.constant 3 : index
      %c0_35 = arith.constant 0 : index
      %c0_36 = arith.constant 0 : index
      %63 = vector.load %arg3[%c3, %c0_35, %c0_36] : memref<4x128x128xbf16, #tpu.memory_space<vmem>>, vector<1x128x128xbf16>
      %64 = vector.shape_cast %63 : vector<1x128x128xbf16> to vector<128x128xbf16>
      %cst_37 = arith.constant dense<0.000000e+00> : vector<16x128xf32>
      %65 = tpu.matmul %62, %64, %cst_37 {dimension_numbers = #tpu.dot_dimension_numbers<[1], [0], [0], [1], [0, 0, 1, 1], [], []>} : vector<16x128xbf16>, vector<128x128xbf16>, vector<16x128xf32> -> vector<16x128xf32>
      %c3_38 = arith.constant 3 : index
      %c0_39 = arith.constant 0 : index
      %c0_40 = arith.constant 0 : index
      %66 = vector.load %arg4[%c3_38, %c0_39, %c0_40] : memref<4x1x128xf32, #tpu.memory_space<vmem>>, vector<1x1x128xf32>
      %67 = vector.shape_cast %66 : vector<1x1x128xf32> to vector<1x128xf32>
      %68 = vector.broadcast %67 : vector<1x128xf32> to vector<16x128xf32>
      %69 = arith.addf %65, %68 : vector<16x128xf32>
      %70 = arith.index_cast %1 : i32 to index
      %c0_41 = arith.constant 0 : index
      %71 = vector.load %arg6[%70, %c0_41] : memref<64x128xf32, #tpu.memory_space<vmem>>, vector<16x128xf32>
      tpu.vector_store %arg6[%70, %c0_41], %69 {strides = array<i32>} : memref<64x128xf32, #tpu.memory_space<vmem>>, vector<16x128xf32>,
      %c0_42 = arith.constant 0 : index
      %c0_43 = arith.constant 0 : index
      %72 = vector.load %arg7[%c0_42, %c0_43] : memref<1x128xf32, #tpu.memory_space<vmem>>, vector<1x128xf32>
      %cst_44 = arith.constant dense<0xFF800000> : vector<128xf32>
      %73 = vector.multi_reduction <maximumf>, %69, %cst_44 [0] : vector<16x128xf32> to vector<128xf32>
      %74 = vector.shape_cast %73 : vector<128xf32> to vector<1x128xf32>
      %75 = arith.maximumf %72, %74 : vector<1x128xf32>
      %c0_45 = arith.constant 0 : index
      %c0_46 = arith.constant 0 : index
      %76 = vector.load %arg8[%c0_45, %c0_46] : memref<1x128xf32, #tpu.memory_space<vmem>>, vector<1x128xf32>
      %c0_47 = arith.constant 0 : index
      %c0_48 = arith.constant 0 : index
      %77 = vector.load %arg7[%c0_47, %c0_48] : memref<1x128xf32, #tpu.memory_space<vmem>>, vector<1x128xf32>
      %78 = arith.subf %77, %75 : vector<1x128xf32>
      %79 = math.exp %78 : vector<1x128xf32>
      %80 = arith.mulf %76, %79 : vector<1x128xf32>
      %81 = vector.broadcast %75 : vector<1x128xf32> to vector<16x128xf32>
      %82 = arith.subf %69, %81 : vector<16x128xf32>
      %83 = math.exp %82 : vector<16x128xf32>
      %cst_49 = arith.constant dense<0.000000e+00> : vector<128xf32>
      %84 = vector.multi_reduction <add>, %83, %cst_49 [0] : vector<16x128xf32> to vector<128xf32>
      %85 = vector.shape_cast %84 : vector<128xf32> to vector<1x128xf32>
      %86 = arith.addf %80, %85 : vector<1x128xf32>
      %c0_50 = arith.constant 0 : index
      %c0_51 = arith.constant 0 : index
      %87 = vector.load %arg8[%c0_50, %c0_51] : memref<1x128xf32, #tpu.memory_space<vmem>>, vector<1x128xf32>
      tpu.vector_store %arg8[%c0_50, %c0_51], %86 {strides = array<i32>} : memref<1x128xf32, #tpu.memory_space<vmem>>, vector<1x128xf32>,
      %c0_52 = arith.constant 0 : index
      %c0_53 = arith.constant 0 : index
      %88 = vector.load %arg7[%c0_52, %c0_53] : memref<1x128xf32, #tpu.memory_space<vmem>>, vector<1x128xf32>
      tpu.vector_store %arg7[%c0_52, %c0_53], %75 {strides = array<i32>} : memref<1x128xf32, #tpu.memory_space<vmem>>, vector<1x128xf32>,
    } else {
    }
    %c1_i32 = arith.constant 1 : i32
    %5 = arith.cmpi eq, %arg0, %c1_i32 : i32
    %6 = arith.extui %5 : i1 to i32
    %c0_i32_1 = arith.constant 0 : i32
    %7 = arith.cmpi ne, %6, %c0_i32_1 : i32
    scf.if %7 {
      %8 = arith.index_cast %1 : i32 to index
      %c0 = arith.constant 0 : index
      %9 = vector.load %arg6[%8, %c0] : memref<64x128xf32, #tpu.memory_space<vmem>>, vector<16x128xf32>
      %c0_2 = arith.constant 0 : index
      %c0_3 = arith.constant 0 : index
      %10 = vector.load %arg7[%c0_2, %c0_3] : memref<1x128xf32, #tpu.memory_space<vmem>>, vector<1x128xf32>
      %11 = vector.broadcast %10 : vector<1x128xf32> to vector<16x128xf32>
      %12 = arith.subf %9, %11 : vector<16x128xf32>
      %13 = math.exp %12 : vector<16x128xf32>
      %c0_4 = arith.constant 0 : index
      %c0_5 = arith.constant 0 : index
      %14 = vector.load %arg8[%c0_4, %c0_5] : memref<1x128xf32, #tpu.memory_space<vmem>>, vector<1x128xf32>
      %cst = arith.constant 1.000000e+00 : f32
      %15 = vector.broadcast %cst : f32 to vector<1x128xf32>
      %16 = arith.divf %15, %14 : vector<1x128xf32>
      %17 = vector.broadcast %16 : vector<1x128xf32> to vector<16x128xf32>
      %18 = arith.mulf %13, %17 : vector<16x128xf32>
      %c0_6 = arith.constant 0 : index
      %c0_7 = arith.constant 0 : index
      %19 = vector.load %arg5[%c0_6, %c0_7] : memref<16x128xf32, #tpu.memory_space<vmem>>, vector<16x128xf32>
      tpu.vector_store %arg5[%c0_6, %c0_7], %18 {strides = array<i32>} : memref<16x128xf32, #tpu.memory_space<vmem>>, vector<16x128xf32>,
    } else {
    }
    return
  }
  func.func @transform_0(%arg0: i32, %arg1: i32) -> (i32, i32) {
    %c1_i32 = arith.constant 1 : i32
    %0 = arith.subi %c1_i32, %arg0 : i32
    %1 = arith.muli %0, %arg1 : i32
    %c0_i32 = arith.constant 0 : i32
    %c0_i32_0 = arith.constant 0 : i32
    return %1, %c0_i32 : i32, i32
  }
  func.func @transform_1(%arg0: i32, %arg1: i32) -> (i32, i32, i32) {
    %c0_i32 = arith.constant 0 : i32
    %c0_i32_0 = arith.constant 0 : i32
    %c0_i32_1 = arith.constant 0 : i32
    %c0_i32_2 = arith.constant 0 : i32
    return %c0_i32, %c0_i32_0, %c0_i32_1 : i32, i32, i32
  }
  func.func @transform_2(%arg0: i32, %arg1: i32) -> (i32, i32, i32) {
    %c0_i32 = arith.constant 0 : i32
    %c0_i32_0 = arith.constant 0 : i32
    %c0_i32_1 = arith.constant 0 : i32
    %c0_i32_2 = arith.constant 0 : i32
    return %c0_i32, %c0_i32_0, %c0_i32_1 : i32, i32, i32
  }
  func.func @transform_3(%arg0: i32, %arg1: i32) -> (i32, i32) {
    %0 = arith.muli %arg0, %arg1 : i32
    %c0_i32 = arith.constant 0 : i32
    %c0_i32_0 = arith.constant 0 : i32
    return %0, %c0_i32 : i32, i32
  }
}

</mosaic_0001>

<llo_original>
// kernel: forward.1
$region0: #{forward.1}
  #allocation0 [shape = 'u32[]', space=smem, size = 0x4, offset = 0x4, fixed_abs, tag = 'smem constant byte address 0x4 - core index']
  #allocation1 [shape = 'u32[72,128]{1,0:T(1,128)}', space=vmem, size = 0x9000, scoped, tag = 'internal scratch']
  #allocation2 [shape = 'f32[64,128]{1,0:T(8,128)}', space=vmem, size = 0x8000, scoped, tag = 'scratch operand']
  #allocation3 [shape = 'f32[1,128]{1,0:T(1,128)}', space=vmem, size = 0x200, scoped, tag = 'scratch operand']
  #allocation4 [shape = 'f32[1,128]{1,0:T(1,128)}', space=vmem, size = 0x200, scoped, tag = 'scratch operand']
  %s0 = inlined_call_operand.vmem [shape: bf16[64,128], index: 0, kind: input, shape index: {}]
  %s1 = inlined_call_operand.hbm [shape: bf16[4,128,128], index: 1, kind: input, shape index: {}]
  %s2 = inlined_call_operand.vmem [shape: f32[4,1,128], index: 2, kind: input, shape index: {}]
  %s3 = inlined_call_operand.vmem [shape: f32[64,128], index: 3, kind: output, shape index: {}]
  %s4 = sld [smem:[#allocation0]]
  $region61: #{forward.1} parent=0
    _
  %s6 = ssub.s32 1, %s4
  %s7 = scalar_select 0, %s6, %s4
  $region1: #{forward.1} parent=0
    #allocation5 [shape = 'u8[131072]{0}', space=vmem, size = 0x20000, scoped, tag = 'input window, operand 1, single buffered']
    #allocation6 [shape = 's32[2]{0}', space=sflag, size = 0x8, scoped, tag = 'scoped memory for forward.1']
    %8 = vsyncpa [#allocation6], 0
    loop: start=0, step=1, limit=10
    $region2: #{forward.1} parent=1 // loop_pre_header
      _
    $region3: #{forward.1} parent=1 // loop_header
      %s10 = sphi 0, %s14
      %p11 = scmp.ge.s32.totalorder %s10, 10
      %s17 = sphi 0, %s29
      %s18 = sphi 0, %s25
      %s19 = sphi 0, %s17
      %s20 = sphi 0, %s18
      %s21 = sphi 0, %s19
      %s22 = sphi 0, %s20
      %s36 = sphi 0, %s38
      %s39 = sphi 0, %s36
      %s40 = sphi 0, %s39
      %s56 = sphi 0, %s40
      %s60 = sphi 0, %s60
      %s62 = sphi 0, %s60
      %s63 = sphi 0, %s62
      %s77 = sphi 0, %s63
      %s81 = sphi 0, %s81
      %s83 = sphi 0, %s81
      %s84 = sphi 0, %s83
      %s98 = sphi 0, %s84
      %s106 = sphi 0, %s108
      %s109 = sphi 0, %s106
      %s110 = sphi 0, %s109
      %s126 = sphi 0, %s110
    $region4: #{forward.1} parent=1 // loop_header_branch
      %13 = sbr.rel (%p11) target = $region8
    $region5: #{forward.1} parent=1 // loop_body
      %s15 = ssub.s32 %s10, 1
      %s16 = ssub.s32 %s10, 2
      %s23 = sadd.s32 1, %s18
      %p24 = scmp.ge.s32.totalorder %s23, 4
      %s25 = scalar_select %p24, 0, %s23
      %s26 = sadd.s32 1, %s17
      %s27 = scalar_select %p24, %s26, %s17
      %p28 = scmp.ge.s32.totalorder %s27, 2
      %s29 = scalar_select %p28, 0, %s27
      %s30 = ssub.s32 1, %s17
      %s31 = smul.u32 %s30, %s18
      %s32 = ssub.s32 1, %s29
      %s33 = smul.u32 %s32, %s25
      %s34 = ssub.s32 %s31, %s33
      %p35 = scmp.eq.s32.totalorder %s34, 0
      %s37 = sadd.s32 %s36, 1
      %s38 = scalar_select %p35, %s36, %s37
      %p41 = pneg %p35
      %p42 = scmp.eq.s32.totalorder %s10, 7
      %p43 = por %p41, %p42
      %p44 = scmp.ne.s32.totalorder %s36, %s39
      %p45 = scmp.eq.s32.totalorder %s10, 0
      %p46 = por %p44, %p45
      %p47 = scmp.ne.s32.totalorder %s36, %s39
      %p48 = scmp.eq.s32.totalorder %s15, 7
      %p49 = por %p47, %p48
      %p50 = scmp.ne.s32.totalorder %s39, %s40
      %p51 = scmp.eq.s32.totalorder %s15, 0
      %p52 = por %p50, %p51
      %p53 = scmp.ne.s32.totalorder %s39, %s40
      %p54 = scmp.eq.s32.totalorder %s16, 7
      %p55 = por %p53, %p54
      %p57 = scmp.ne.s32.totalorder %s40, %s56
      %p58 = scmp.eq.s32.totalorder %s16, 0
      %p59 = por %p57, %p58
      %s61 = sadd.s32 %s60, 1
      %p64 = scmp.eq.s32.totalorder %s10, 7
      %p65 = scmp.ne.s32.totalorder %s60, %s62
      %p66 = scmp.eq.s32.totalorder %s10, 0
      %p67 = por %p65, %p66
      %p68 = scmp.ne.s32.totalorder %s60, %s62
      %p69 = scmp.eq.s32.totalorder %s15, 7
      %p70 = por %p68, %p69
      %p71 = scmp.ne.s32.totalorder %s62, %s63
      %p72 = scmp.eq.s32.totalorder %s15, 0
      %p73 = por %p71, %p72
      %p74 = scmp.ne.s32.totalorder %s62, %s63
      %p75 = scmp.eq.s32.totalorder %s16, 7
      %p76 = por %p74, %p75
      %p78 = scmp.ne.s32.totalorder %s63, %s77
      %p79 = scmp.eq.s32.totalorder %s16, 0
      %p80 = por %p78, %p79
      %s82 = sadd.s32 %s81, 1
      %p85 = scmp.eq.s32.totalorder %s10, 7
      %p86 = scmp.ne.s32.totalorder %s81, %s83
      %p87 = scmp.eq.s32.totalorder %s10, 0
      %p88 = por %p86, %p87
      %p89 = scmp.ne.s32.totalorder %s81, %s83
      %p90 = scmp.eq.s32.totalorder %s15, 7
      %p91 = por %p89, %p90
      %p92 = scmp.ne.s32.totalorder %s83, %s84
      %p93 = scmp.eq.s32.totalorder %s15, 0
      %p94 = por %p92, %p93
      %p95 = scmp.ne.s32.totalorder %s83, %s84
      %p96 = scmp.eq.s32.totalorder %s16, 7
      %p97 = por %p95, %p96
      %p99 = scmp.ne.s32.totalorder %s84, %s98
      %p100 = scmp.eq.s32.totalorder %s16, 0
      %p101 = por %p99, %p100
      %s102 = smul.u32 %s17, %s18
      %s103 = smul.u32 %s29, %s25
      %s104 = ssub.s32 %s102, %s103
      %p105 = scmp.eq.s32.totalorder %s104, 0
      %s107 = sadd.s32 %s106, 1
      %s108 = scalar_select %p105, %s106, %s107
      %p111 = pneg %p105
      %p112 = scmp.eq.s32.totalorder %s10, 7
      %p113 = por %p111, %p112
      %p114 = scmp.ne.s32.totalorder %s106, %s109
      %p115 = scmp.eq.s32.totalorder %s10, 0
      %p116 = por %p114, %p115
      %p117 = scmp.ne.s32.totalorder %s106, %s109
      %p118 = scmp.eq.s32.totalorder %s15, 7
      %p119 = por %p117, %p118
      %p120 = scmp.ne.s32.totalorder %s109, %s110
      %p121 = scmp.eq.s32.totalorder %s15, 0
      %p122 = por %p120, %p121
      %p123 = scmp.ne.s32.totalorder %s109, %s110
      %p124 = scmp.eq.s32.totalorder %s16, 7
      %p125 = por %p123, %p124
      %p127 = scmp.ne.s32.totalorder %s110, %s126
      %p128 = scmp.eq.s32.totalorder %s16, 0
      %p129 = por %p127, %p128
      %p130 = scmp.le.s32.totalorder 1, %s10
      %p131 = scmp.lt.s32.totalorder %s10, 9
      %p132 = pnand %p130, %p131
      %p133 = pneg %p132
      // Predicated region
      $region9: #{forward.1} parent=5 // pred_check
        _
      $region10: #{forward.1} parent=5 // pred_check_branch
        %135 = sbr.rel (%p132) target = $region12
      $region11: #{forward.1} parent=5 // pred_region
        %s136 = ssub.s32 %s10, 1
        // Predicated region
        $region13: #{forward.1} parent=11 // pred_check
          %p137 = pneg %p73
        $region14: #{forward.1} parent=11 // pred_check_branch
          %139 = sbr.rel (%p137) target = $region16
        $region15: #{forward.1} parent=11 // pred_region
          %141 = vsyncadd [#allocation6], 0
          %s142 = sshll.u32 %s1, 4
          %s143 = int_to_ptr.hbm [resolvable:$true] %s142
          %s144 = sshll.u32 [#allocation5], 4
          %s145 = int_to_ptr.vmem [resolvable:$true] %s144
          %150 = dma.hbm_to_vmem [thread:$0]  %s143, 4096, %s145, [#allocation6], 64, 64, 4
        $region16: #{forward.1} parent=11 // pred_fallthru
          _
        // Predicated region
        $region17: #{forward.1} parent=11 // pred_check
          %p151 = pneg %p94
        $region18: #{forward.1} parent=11 // pred_check_branch
          %153 = sbr.rel (%p151) target = $region20
        $region19: #{forward.1} parent=11 // pred_region
          _
        $region20: #{forward.1} parent=11 // pred_fallthru
          _
      $region12: #{forward.1} parent=5 // pred_fallthru
        _
      %p154 = scmp.lt.s32.totalorder %s10, 8
      // Predicated region
      $region21: #{forward.1} parent=5 // pred_check
        %p155 = pneg %p154
      $region22: #{forward.1} parent=5 // pred_check_branch
        %157 = sbr.rel (%p155) target = $region24
      $region23: #{forward.1} parent=5 // pred_region
        // Predicated region
        $region25: #{forward.1} parent=23 // pred_check
          %p158 = pneg %p46
        $region26: #{forward.1} parent=23 // pred_check_branch
          %160 = sbr.rel (%p158) target = $region28
        $region27: #{forward.1} parent=23 // pred_region
          %s161 = ssub.s32 1, %s17
          %s162 = smul.u32 %s161, %s18
          %s163 = smul.u32 2, %s162
          %p164 = scmp.lt.s32.totalorder %s163, 7
          %s165 = scalar_select %p164, %s163, 7
          %s166 = smul.addr %s165, 4
          %s167 = scalar_lea.vmem %s0, %s166
          %s168 = ssub.s32 1, %s17
          %s169 = smul.u32 %s168, %s18
          %s170 = smul.u32 2, %s169
        $region28: #{forward.1} parent=23 // pred_fallthru
          _
      $region24: #{forward.1} parent=5 // pred_fallthru
        _
      %p171 = scmp.le.s32.totalorder 1, %s10
      %p172 = scmp.lt.s32.totalorder %s10, 9
      %p173 = pnand %p171, %p172
      %p174 = pneg %p173
      // Predicated region
      $region29: #{forward.1} parent=5 // pred_check
        _
      $region30: #{forward.1} parent=5 // pred_check_branch
        %176 = sbr.rel (%p173) target = $region32
      $region31: #{forward.1} parent=5 // pred_region
        %s177 = ssub.s32 %s10, 1
        // Predicated region
        $region33: #{forward.1} parent=31 // pred_check
          %p178 = pneg %p73
        $region34: #{forward.1} parent=31 // pred_check_branch
          %180 = sbr.rel (%p178) target = $region36
        $region35: #{forward.1} parent=31 // pred_region
          %182 = dma.done [#allocation6], 4096
        $region36: #{forward.1} parent=31 // pred_fallthru
          _
        %s183 = ssub.s32 1, %s19
        %s184 = smul.u32 %s183, %s20
        %s185 = smul.u32 2, %s184
        %p186 = scmp.lt.s32.totalorder %s185, 7
        %s187 = scalar_select %p186, %s185, 7
        %s188 = smul.addr %s187, 4
        %s189 = scalar_lea.vmem %s0, %s188
        %p190 = pneg %p52
        %p191 = pneg %p49
        %p192 = pneg %p73
        %p193 = pneg %p70
        %p194 = pneg %p94
        %p195 = pneg %p91
        %p196 = pneg %p122
        %p197 = pneg %p119
        %s198 = smul.u32 %s19, %s20
        %s199 = smul.u32 2, %s198
        %p200 = scmp.lt.s32.totalorder %s199, 7
        %s201 = scalar_select %p200, %s199, 7
        %s202 = smul.addr %s201, 8
        %s203 = scalar_lea.vmem %s3, %s202
        %s204 = ssub.s32 1, %s19
        %s205 = smul.u32 %s204, %s20
        %s206 = smul.u32 2, %s205
        %p207 = scmp.lt.s32.totalorder %s206, 7
        %s208 = scalar_select %p207, %s206, 7
        %s209 = smul.addr %s208, 4
        %s210 = scalar_lea.vmem %s0, %s209
        %s211 = ssub.s32 1, %s19
        %s212 = smul.u32 %s211, %s20
        %s213 = smul.u32 2, %s212
        %s214 = smul.u32 %s19, %s20
        %s215 = smul.u32 2, %s214
        %p216 = scmp.lt.s32.totalorder %s215, 7
        %s217 = scalar_select %p216, %s215, 7
        %s218 = smul.addr %s217, 8
        %s219 = scalar_lea.vmem %s3, %s218
        %s220 = smul.u32 %s19, %s20
        %s221 = smul.u32 2, %s220
        %s222 = smul.u32 %s20, 16
        %p223 = scmp.eq.s32.totalorder %s19, 0
        // Predicated region
        $region37: #{forward.1} parent=31 // pred_check
          %p224 = pneg %p223
        $region38: #{forward.1} parent=31 // pred_check_branch
          %226 = sbr.rel (%p224) target = $region40
        $region39: #{forward.1} parent=31 // pred_region
          %p227 = scmp.eq.s32.totalorder %s20, 0
          // Predicated region
          $region41: #{forward.1} parent=39 // pred_check
            %p228 = pneg %p227
          $region42: #{forward.1} parent=39 // pred_check_branch
            %230 = sbr.rel (%p228) target = $region44
          $region43: #{forward.1} parent=39 // pred_region
            %231 = vst [vmem:[#allocation3] sm:$0x1] -1e+30
            %232 = vst [vmem:[#allocation4] sm:$0x1] 0.0
          $region44: #{forward.1} parent=39 // pred_fallthru
            _
          %v233 = vld [vmem:[%s210] sm:$0xf]
          %v234 = vld [vmem:[%s210 + $0x4] sm:$0xf]
          %v235 = vld [vmem:[#allocation5] sm:$0xf]
          %v236 = vld [vmem:[#allocation5 + $0x4] sm:$0xf]
          %v237 = vld [vmem:[#allocation5 + $0x8] sm:$0xf]
          %v238 = vld [vmem:[#allocation5 + $0xc] sm:$0xf]
          %v239 = vld [vmem:[#allocation5 + $0x10] sm:$0xf]
          %v240 = vld [vmem:[#allocation5 + $0x14] sm:$0xf]
          %v241 = vld [vmem:[#allocation5 + $0x18] sm:$0xf]
          %v242 = vld [vmem:[#allocation5 + $0x1c] sm:$0xf]
          %v243 = vld [vmem:[#allocation5 + $0x20] sm:$0xf]
          %v244 = vld [vmem:[#allocation5 + $0x24] sm:$0xf]
          %v245 = vld [vmem:[#allocation5 + $0x28] sm:$0xf]
          %v246 = vld [vmem:[#allocation5 + $0x2c] sm:$0xf]
          %v247 = vld [vmem:[#allocation5 + $0x30] sm:$0xf]
          %v248 = vld [vmem:[#allocation5 + $0x34] sm:$0xf]
          %v249 = vld [vmem:[#allocation5 + $0x38] sm:$0xf]
          %v250 = vld [vmem:[#allocation5 + $0x3c] sm:$0xf]
          %v251 = vld [vmem:[%s2] sm:$0x1]
          %v253 = vperm.slane %v251, 0
          %v257 = vunpack.c.l.b16 %v233
          %v258 = vunpack.c.l.b16 %v234
          %v259 = vpack.c.b16 %v258, %v257
          %v277 = vunpack.c.l.b16 %v235
          %v278 = vunpack.c.l.b16 %v236
          %v279 = vunpack.c.l.b16 %v237
          %v280 = vunpack.c.l.b16 %v238
          %v281 = vunpack.c.l.b16 %v239
          %v282 = vunpack.c.l.b16 %v240
          %v283 = vunpack.c.l.b16 %v241
          %v284 = vunpack.c.l.b16 %v242
          %v285 = vunpack.c.l.b16 %v243
          %v286 = vunpack.c.l.b16 %v244
          %v287 = vunpack.c.l.b16 %v245
          %v288 = vunpack.c.l.b16 %v246
          %v289 = vunpack.c.l.b16 %v247
          %v290 = vunpack.c.l.b16 %v248
          %v291 = vunpack.c.l.b16 %v249
          %v292 = vunpack.c.l.b16 %v250
          %v293 = vpack.c.b16 %v278, %v277
          %v294 = vpack.c.b16 %v280, %v279
          %v295 = vpack.c.b16 %v282, %v281
          %v296 = vpack.c.b16 %v284, %v283
          %v297 = vpack.c.b16 %v286, %v285
          %v298 = vpack.c.b16 %v288, %v287
          %v299 = vpack.c.b16 %v290, %v289
          %v300 = vpack.c.b16 %v292, %v291
          %309 = vmatpush.bf16.msra.mxu0 %v300
          %310 = vmatpush.bf16.msra.mxu0 %v299
          %311 = vmatpush.bf16.msra.mxu0 %v298
          %312 = vmatpush.bf16.msra.mxu0 %v297
          %313 = vmatpush.bf16.msra.mxu0 %v296
          %314 = vmatpush.bf16.msra.mxu0 %v295
          %315 = vmatpush.bf16.msra.mxu0 %v294
          %316 = vmatpush.bf16.msra.mxu0 %v293
          %317 = vmatmul.bf16.gmra.mxu0 %v259
          %v318 = vpop.f32.mrf.mxu0
          %v319 = vadd.f32 %v253, %v318
          %v320 = vpop.f32.mrf.mxu0
          %v321 = vadd.f32 %v253, %v320
          %322 = vdwg.mxu0
          %v323 = vmax.f32 %v319, 0.0
          %v324 = vmax.f32 %v321, 0.0
          %v325 = vmin.f32 %v323, 6.0
          %v326 = vmin.f32 %v324, 6.0
          %v327 = vmul.f32 %v325, 2.5
          %v328 = vmul.f32 %v326, 2.5
          %v329 = vround.ne.pseudo %v327
          %v330 = vround.ne.pseudo %v328
          %v331 = vmul.f32 %v329, 0.4
          %v332 = vmul.f32 %v330, 0.4
          %v333 = vpack.c.bf16 %v332, %v331
          %s334 = scalar_lea.vmem [#allocation5], 64
          %v335 = vld [vmem:[%s334] sm:$0xf]
          %v336 = vld [vmem:[%s334 + $0x4] sm:$0xf]
          %v337 = vld [vmem:[%s334 + $0x8] sm:$0xf]
          %v338 = vld [vmem:[%s334 + $0xc] sm:$0xf]
          %v339 = vld [vmem:[%s334 + $0x10] sm:$0xf]
          %v340 = vld [vmem:[%s334 + $0x14] sm:$0xf]
          %v341 = vld [vmem:[%s334 + $0x18] sm:$0xf]
          %v342 = vld [vmem:[%s334 + $0x1c] sm:$0xf]
          %v343 = vld [vmem:[%s334 + $0x20] sm:$0xf]
          %v344 = vld [vmem:[%s334 + $0x24] sm:$0xf]
          %v345 = vld [vmem:[%s334 + $0x28] sm:$0xf]
          %v346 = vld [vmem:[%s334 + $0x2c] sm:$0xf]
          %v347 = vld [vmem:[%s334 + $0x30] sm:$0xf]
          %v348 = vld [vmem:[%s334 + $0x34] sm:$0xf]
          %v349 = vld [vmem:[%s334 + $0x38] sm:$0xf]
          %v350 = vld [vmem:[%s334 + $0x3c] sm:$0xf]
          %s351 = scalar_lea.vmem %s2, 1
          %v352 = vld [vmem:[%s351] sm:$0x1]
          %v354 = vperm.slane %v352, 0
          %v372 = vunpack.c.l.b16 %v335
          %v373 = vunpack.c.l.b16 %v336
          %v374 = vunpack.c.l.b16 %v337
          %v375 = vunpack.c.l.b16 %v338
          %v376 = vunpack.c.l.b16 %v339
          %v377 = vunpack.c.l.b16 %v340
          %v378 = vunpack.c.l.b16 %v341
          %v379 = vunpack.c.l.b16 %v342
          %v380 = vunpack.c.l.b16 %v343
          %v381 = vunpack.c.l.b16 %v344
          %v382 = vunpack.c.l.b16 %v345
          %v383 = vunpack.c.l.b16 %v346
          %v384 = vunpack.c.l.b16 %v347
          %v385 = vunpack.c.l.b16 %v348
          %v386 = vunpack.c.l.b16 %v349
          %v387 = vunpack.c.l.b16 %v350
          %v388 = vpack.c.b16 %v373, %v372
          %v389 = vpack.c.b16 %v375, %v374
          %v390 = vpack.c.b16 %v377, %v376
          %v391 = vpack.c.b16 %v379, %v378
          %v392 = vpack.c.b16 %v381, %v380
          %v393 = vpack.c.b16 %v383, %v382
          %v394 = vpack.c.b16 %v385, %v384
          %v395 = vpack.c.b16 %v387, %v386
          %404 = vmatpush.bf16.msra.mxu0 %v395
          %405 = vmatpush.bf16.msra.mxu0 %v394
          %406 = vmatpush.bf16.msra.mxu0 %v393
          %407 = vmatpush.bf16.msra.mxu0 %v392
          %408 = vmatpush.bf16.msra.mxu0 %v391
          %409 = vmatpush.bf16.msra.mxu0 %v390
          %410 = vmatpush.bf16.msra.mxu0 %v389
          %411 = vmatpush.bf16.msra.mxu0 %v388
          %412 = vmatmul.bf16.gmra.mxu0 %v333
          %v413 = vpop.f32.mrf.mxu0
          %v414 = vadd.f32 %v354, %v413
          %v415 = vpop.f32.mrf.mxu0
          %v416 = vadd.f32 %v354, %v415
          %417 = vdwg.mxu0
          %v418 = vmax.f32 %v414, 0.0
          %v419 = vmax.f32 %v416, 0.0
          %v420 = vmin.f32 %v418, 6.0
          %v421 = vmin.f32 %v419, 6.0
          %v422 = vmul.f32 %v420, 2.5
          %v423 = vmul.f32 %v421, 2.5
          %v424 = vround.ne.pseudo %v422
          %v425 = vround.ne.pseudo %v423
          %v426 = vmul.f32 %v424, 0.4
          %v427 = vmul.f32 %v425, 0.4
          %v428 = vpack.c.bf16 %v427, %v426
          %s429 = scalar_lea.vmem [#allocation5], 128
          %v430 = vld [vmem:[%s429] sm:$0xf]
          %v431 = vld [vmem:[%s429 + $0x4] sm:$0xf]
          %v432 = vld [vmem:[%s429 + $0x8] sm:$0xf]
          %v433 = vld [vmem:[%s429 + $0xc] sm:$0xf]
          %v434 = vld [vmem:[%s429 + $0x10] sm:$0xf]
          %v435 = vld [vmem:[%s429 + $0x14] sm:$0xf]
          %v436 = vld [vmem:[%s429 + $0x18] sm:$0xf]
          %v437 = vld [vmem:[%s429 + $0x1c] sm:$0xf]
          %v438 = vld [vmem:[%s429 + $0x20] sm:$0xf]
          %v439 = vld [vmem:[%s429 + $0x24] sm:$0xf]
          %v440 = vld [vmem:[%s429 + $0x28] sm:$0xf]
          %v441 = vld [vmem:[%s429 + $0x2c] sm:$0xf]
          %v442 = vld [vmem:[%s429 + $0x30] sm:$0xf]
          %v443 = vld [vmem:[%s429 + $0x34] sm:$0xf]
          %v444 = vld [vmem:[%s429 + $0x38] sm:$0xf]
          %v445 = vld [vmem:[%s429 + $0x3c] sm:$0xf]
          %s446 = scalar_lea.vmem %s2, 2
          %v447 = vld [vmem:[%s446] sm:$0x1]
          %v449 = vperm.slane %v447, 0
          %v467 = vunpack.c.l.b16 %v430
          %v468 = vunpack.c.l.b16 %v431
          %v469 = vunpack.c.l.b16 %v432
          %v470 = vunpack.c.l.b16 %v433
          %v471 = vunpack.c.l.b16 %v434
          %v472 = vunpack.c.l.b16 %v435
          %v473 = vunpack.c.l.b16 %v436
          %v474 = vunpack.c.l.b16 %v437
          %v475 = vunpack.c.l.b16 %v438
          %v476 = vunpack.c.l.b16 %v439
          %v477 = vunpack.c.l.b16 %v440
          %v478 = vunpack.c.l.b16 %v441
          %v479 = vunpack.c.l.b16 %v442
          %v480 = vunpack.c.l.b16 %v443
          %v481 = vunpack.c.l.b16 %v444
          %v482 = vunpack.c.l.b16 %v445
          %v483 = vpack.c.b16 %v468, %v467
          %v484 = vpack.c.b16 %v470, %v469
          %v485 = vpack.c.b16 %v472, %v471
          %v486 = vpack.c.b16 %v474, %v473
          %v487 = vpack.c.b16 %v476, %v475
          %v488 = vpack.c.b16 %v478, %v477
          %v489 = vpack.c.b16 %v480, %v479
          %v490 = vpack.c.b16 %v482, %v481
          %499 = vmatpush.bf16.msra.mxu0 %v490
          %500 = vmatpush.bf16.msra.mxu0 %v489
          %501 = vmatpush.bf16.msra.mxu0 %v488
          %502 = vmatpush.bf16.msra.mxu0 %v487
          %503 = vmatpush.bf16.msra.mxu0 %v486
          %504 = vmatpush.bf16.msra.mxu0 %v485
          %505 = vmatpush.bf16.msra.mxu0 %v484
          %506 = vmatpush.bf16.msra.mxu0 %v483
          %507 = vmatmul.bf16.gmra.mxu0 %v428
          %v508 = vpop.f32.mrf.mxu0
          %v509 = vadd.f32 %v449, %v508
          %v510 = vpop.f32.mrf.mxu0
          %v511 = vadd.f32 %v449, %v510
          %512 = vdwg.mxu0
          %v513 = vmax.f32 %v509, 0.0
          %v514 = vmax.f32 %v511, 0.0
          %v515 = vmin.f32 %v513, 6.0
          %v516 = vmin.f32 %v514, 6.0
          %v517 = vmul.f32 %v515, 2.5
          %v518 = vmul.f32 %v516, 2.5
          %v519 = vround.ne.pseudo %v517
          %v520 = vround.ne.pseudo %v518
          %v521 = vmul.f32 %v519, 0.4
          %v522 = vmul.f32 %v520, 0.4
          %v523 = vpack.c.bf16 %v522, %v521
          %s524 = scalar_lea.vmem [#allocation5], 192
          %v525 = vld [vmem:[%s524] sm:$0xf]
          %v526 = vld [vmem:[%s524 + $0x4] sm:$0xf]
          %v527 = vld [vmem:[%s524 + $0x8] sm:$0xf]
          %v528 = vld [vmem:[%s524 + $0xc] sm:$0xf]
          %v529 = vld [vmem:[%s524 + $0x10] sm:$0xf]
          %v530 = vld [vmem:[%s524 + $0x14] sm:$0xf]
          %v531 = vld [vmem:[%s524 + $0x18] sm:$0xf]
          %v532 = vld [vmem:[%s524 + $0x1c] sm:$0xf]
          %v533 = vld [vmem:[%s524 + $0x20] sm:$0xf]
          %v534 = vld [vmem:[%s524 + $0x24] sm:$0xf]
          %v535 = vld [vmem:[%s524 + $0x28] sm:$0xf]
          %v536 = vld [vmem:[%s524 + $0x2c] sm:$0xf]
          %v537 = vld [vmem:[%s524 + $0x30] sm:$0xf]
          %v538 = vld [vmem:[%s524 + $0x34] sm:$0xf]
          %v539 = vld [vmem:[%s524 + $0x38] sm:$0xf]
          %v540 = vld [vmem:[%s524 + $0x3c] sm:$0xf]
          %s541 = scalar_lea.vmem %s2, 3
          %v542 = vld [vmem:[%s541] sm:$0x1]
          %v544 = vperm.slane %v542, 0
          %v562 = vunpack.c.l.b16 %v525
          %v563 = vunpack.c.l.b16 %v526
          %v564 = vunpack.c.l.b16 %v527
          %v565 = vunpack.c.l.b16 %v528
          %v566 = vunpack.c.l.b16 %v529
          %v567 = vunpack.c.l.b16 %v530
          %v568 = vunpack.c.l.b16 %v531
          %v569 = vunpack.c.l.b16 %v532
          %v570 = vunpack.c.l.b16 %v533
          %v571 = vunpack.c.l.b16 %v534
          %v572 = vunpack.c.l.b16 %v535
          %v573 = vunpack.c.l.b16 %v536
          %v574 = vunpack.c.l.b16 %v537
          %v575 = vunpack.c.l.b16 %v538
          %v576 = vunpack.c.l.b16 %v539
          %v577 = vunpack.c.l.b16 %v540
          %v578 = vpack.c.b16 %v563, %v562
          %v579 = vpack.c.b16 %v565, %v564
          %v580 = vpack.c.b16 %v567, %v566
          %v581 = vpack.c.b16 %v569, %v568
          %v582 = vpack.c.b16 %v571, %v570
          %v583 = vpack.c.b16 %v573, %v572
          %v584 = vpack.c.b16 %v575, %v574
          %v585 = vpack.c.b16 %v577, %v576
          %594 = vmatpush.bf16.msra.mxu0 %v585
          %595 = vmatpush.bf16.msra.mxu0 %v584
          %596 = vmatpush.bf16.msra.mxu0 %v583
          %597 = vmatpush.bf16.msra.mxu0 %v582
          %598 = vmatpush.bf16.msra.mxu0 %v581
          %599 = vmatpush.bf16.msra.mxu0 %v580
          %600 = vmatpush.bf16.msra.mxu0 %v579
          %601 = vmatpush.bf16.msra.mxu0 %v578
          %602 = vmatmul.bf16.gmra.mxu0 %v523
          %v603 = vpop.f32.mrf.mxu0
          %v604 = vadd.f32 %v544, %v603
          %v605 = vpop.f32.mrf.mxu0
          %v606 = vadd.f32 %v544, %v605
          %607 = vdwg.mxu0
          %s608 = scalar_lea.vmem [#allocation2], %s222
          %609 = vst [vmem:[%s608] sm:$0xff] %v604
          %610 = vst [vmem:[%s608 + $0x8] sm:$0xff] %v606
          %v611 = vld [vmem:[#allocation3] sm:$0x1]
          %v612 = vmax.f32 %v604, %v606
          %v613 = vrot.slane %v612, 4
          %v614 = vmax.f32 %v612, %v613
          %v615 = vrot.slane %v614, 2
          %v616 = vmax.f32 %v614, %v615
          %v617 = vrot.slane %v616, 1
          %v618 = vmax.f32 %v616, %v617
          %v619 = vmax.f32 %v611, %v618
          %v620 = vld [vmem:[#allocation4] sm:$0x1]
          %v621 = vsub.f32 %v611, %v619
          %v622 = vmul.f32 %v621, 1.442695
          %v623 = vpow.pop %v622
          %v624 = vmul.f32 %v620, %v623
          %v626 = vperm.slane %v619, 0
          %v628 = vsub.f32 %v604, %v626
          %v629 = vsub.f32 %v606, %v626
          %v630 = vmul.f32 %v628, 1.442695
          %v631 = vpow.pop %v630
          %v632 = vmul.f32 %v629, 1.442695
          %v633 = vpow.pop %v632
          %v634 = vadd.f32 %v631, %v633
          %v635 = vrot.slane %v634, 4
          %v636 = vadd.f32 %v634, %v635
          %v637 = vrot.slane %v636, 2
          %v638 = vadd.f32 %v636, %v637
          %v639 = vrot.slane %v638, 1
          %v640 = vadd.f32 %v638, %v639
          %v641 = vadd.f32 %v624, %v640
          %642 = vst [vmem:[#allocation4] sm:$0x1] %v641
          %643 = vst [vmem:[#allocation3] sm:$0x1] %v619
        $region40: #{forward.1} parent=31 // pred_fallthru
          _
        %p644 = scmp.eq.s32.totalorder %s19, 1
        // Predicated region
        $region45: #{forward.1} parent=31 // pred_check
          %p645 = pneg %p644
        $region46: #{forward.1} parent=31 // pred_check_branch
          %647 = sbr.rel (%p645) target = $region48
        $region47: #{forward.1} parent=31 // pred_region
          %s648 = scalar_lea.vmem [#allocation2], %s222
          %v649 = vld [vmem:[%s648] sm:$0xff]
          %v650 = vld [vmem:[%s648 + $0x8] sm:$0xff]
          %v651 = vld [vmem:[#allocation3] sm:$0x1]
          %v653 = vperm.slane %v651, 0
          %v655 = vsub.f32 %v649, %v653
          %v656 = vsub.f32 %v650, %v653
          %v657 = vmul.f32 %v655, 1.442695
          %v658 = vpow.pop %v657
          %v659 = vmul.f32 %v656, 1.442695
          %v660 = vpow.pop %v659
          %v661 = vld [vmem:[#allocation4] sm:$0x1]
          %v662 = vrcp.pop %v661
          %v663 = vmul.f32 %v661, %v662
          %v664 = vsub.f32 1.0, %v663
          %v665 = vmul.f32 %v662, %v664
          %v666 = vadd.f32 %v662, %v665
          %vm667 = vweird.f32 %v661
          %vm668 = vweird.f32 %v662
          %vm669 = vmor %vm667, %vm668
          %v670 = vsel %vm669, %v662, %v666
          %v671 = vand.u32 2147483647, %v661
          %vm672 = vcmp.eq.f32.partialorder %v671, 8.507059e+37
          %v673 = vand.u32 %v661, 2147483648
          %v674 = vor.u32 1.1754944e-38, %v673
          %v675 = vsel %vm672, %v674, %v670
          %v676 = vmul.f32 1.0, %v675
          %v678 = vperm.slane %v676, 0
          %v680 = vmul.f32 %v658, %v678
          %v681 = vmul.f32 %v660, %v678
          %682 = vst [vmem:[%s219] sm:$0xff] %v680
          %683 = vst [vmem:[%s219 + $0x8] sm:$0xff] %v681
        $region48: #{forward.1} parent=31 // pred_fallthru
          _
        %s684 = smul.u32 %s19, %s20
        %s685 = smul.u32 2, %s684
        %p686 = scmp.lt.s32.totalorder %s685, 7
        %s687 = scalar_select %p686, %s685, 7
        %s688 = smul.addr %s687, 8
        %s689 = scalar_lea.vmem %s3, %s688
        // Predicated region
        $region49: #{forward.1} parent=31 // pred_check
          %p690 = pneg %p119
        $region50: #{forward.1} parent=31 // pred_check_branch
          %692 = sbr.rel (%p690) target = $region52
        $region51: #{forward.1} parent=31 // pred_region
          %s693 = smul.u32 %s19, %s20
          %s694 = smul.u32 2, %s693
        $region52: #{forward.1} parent=31 // pred_fallthru
          _
      $region32: #{forward.1} parent=5 // pred_fallthru
        _
      %p695 = scmp.le.s32.totalorder 2, %s10
      // Predicated region
      $region53: #{forward.1} parent=5 // pred_check
        %p696 = pneg %p695
      $region54: #{forward.1} parent=5 // pred_check_branch
        %698 = sbr.rel (%p696) target = $region56
      $region55: #{forward.1} parent=5 // pred_region
        %s699 = ssub.s32 %s10, 2
        // Predicated region
        $region57: #{forward.1} parent=55 // pred_check
          %p700 = pneg %p125
        $region58: #{forward.1} parent=55 // pred_check_branch
          %702 = sbr.rel (%p700) target = $region60
        $region59: #{forward.1} parent=55 // pred_region
          %s703 = smul.u32 %s21, %s22
          %s704 = smul.u32 2, %s703
          %p705 = scmp.lt.s32.totalorder %s704, 7
          %s706 = scalar_select %p705, %s704, 7
          %s707 = smul.addr %s706, 8
          %s708 = scalar_lea.vmem %s3, %s707
        $region60: #{forward.1} parent=55 // pred_fallthru
          _
      $region56: #{forward.1} parent=5 // pred_fallthru
        _
    $region6: #{forward.1} parent=1 // loop_footer
      %s14 = sadd.s32 1, %s10
    $region7: #{forward.1} parent=1 // loop_footer_branch
      %9 = sbr.rel target = $region3
    $region8: #{forward.1} parent=1 // loop_exit
      _
    %709 = vsyncpa [#allocation6], 1
    %s710 = scalar_lea.sflag [#allocation6], 1
    %711 = vsyncpa %s710, 1

</llo_original>
